<compile_context>
chip_gen: v5e
topology: v5e:2x2
jax: 0.10.0
libtpu: 0.0.40
codegen_flags: <defaults>
</compile_context>

<pallas_src>
import math

import jax
import jax.numpy as jnp
from jax.experimental import pallas as pl
from jax.experimental.pallas import tpu as pltpu

_LANE = 128
_MIN_SPLIT_ROWS = 1024  # only force a >=2-tile split when each half has >= this many rows


def _cdiv(a, b):
    return -(-a // b)


def _round_up(x, m):
    return ((x + m - 1) // m) * m


def _qff_kernel(sq_ref, sc_ref, q_ref, c_ref, o_ref):
    # sq/sc are (1, lane_dim) and broadcast over the (tile_rows, lane_dim)
    # q/c tiles on the sublane axis — pure VPU elementwise work.
    o_ref[...] = (
        sq_ref[...] * q_ref[...] + sc_ref[...] * c_ref[...]
    ).astype(o_ref.dtype)


def qff_combiner(s_q, s_c, q, c, *, tile_rows=None,
                 per_array_tile_bytes=4 * 1024 * 1024):
    """out = s_q * q + s_c * c  (scales broadcast over all leading dims of q/c)."""
    assert q.shape == c.shape
    orig_shape = q.shape
    dim = orig_shape[-1]
    assert s_q.shape == (dim,) and s_c.shape == (dim,)

    dtype = q.dtype
    itemsize = jnp.dtype(dtype).itemsize
    # Keep scales in the activation dtype (avoids f32 promotion of bf16 tiles).
    s_q = s_q.astype(dtype)
    s_c = s_c.astype(dtype)

    rows = math.prod(orig_shape[:-1])
    total = rows * dim
    quantum = max(8, 32 // itemsize)  # sublane quantum: 8 f32 / 16 bf16 / 32 i8

    # ---- choose a lane-dense 2-D view (no data movement, no padding) ----
    lcm_dim = (dim * _LANE) // math.gcd(dim, _LANE)
    if total % lcm_dim == 0 and lcm_dim * itemsize <= per_array_tile_bytes:
        # Free contiguous repack to a 128-multiple lane width; scales are tiled
        # lcm/dim times (channel of flat element f is f % dim = lane % dim since
        # lane_dim % dim == 0).
        lane_dim = lcm_dim
        work_rows = total // lcm_dim
        rep = lane_dim // dim
        q2 = q.reshape(work_rows, lane_dim)
        c2 = c.reshape(work_rows, lane_dim)
        sq2 = jnp.tile(s_q, rep).reshape(1, lane_dim)
        sc2 = jnp.tile(s_c, rep).reshape(1, lane_dim)
    else:
        # Keep the true last dim; a block last dim equal to the full array dim
        # is legal, at the cost of partially-masked stores (HBM-bound anyway).
        lane_dim = dim
        work_rows = rows
        q2 = q.reshape(rows, dim)
        c2 = c.reshape(rows, dim)
        sq2 = s_q.reshape(1, dim)
        sc2 = s_c.reshape(1, dim)

    # ---- row-tile sizing from a VMEM budget (safe for v7x's 64 MiB VMEM) ----
    row_bytes = lane_dim * itemsize
    budget_rows = max(quantum, (per_array_tile_bytes // row_bytes) // quantum * quantum)
    if tile_rows is not None:
        budget_rows = max(quantum, (tile_rows // quantum) * quantum)

    if work_rows <= quantum:
        tr = work_rows  # single block equal to the full array (legal for any size)
    elif work_rows <= budget_rows:
        tr = (work_rows // quantum) * quantum  # 1 block (+ small partial trailer)
    else:
        tr = budget_rows
    num_tiles = _cdiv(work_rows, tr)

    # Megacore (v7x: 2 TCs). Only split when each tile keeps substantial work so
    # single-TC v5e/v6e don't pay extra grid-step overhead on small inputs.
    if work_rows >= 2 * _MIN_SPLIT_ROWS:
        if num_tiles == 1:
            tr = _round_up(_cdiv(work_rows, 2), quantum)
            num_tiles = _cdiv(work_rows, tr)
        elif num_tiles % 2 == 1:
            # Nudge to an even tile count so both v7x TensorCores stay busy.
            tr2 = _round_up(_cdiv(work_rows, num_tiles + 1), quantum)
            if tr2 >= quantum:
                tr = tr2
                num_tiles = _cdiv(work_rows, tr)

    # True (unpadded) work for the advisory cost estimate.
    cost = pl.CostEstimate(
        flops=3 * total,
        transcendentals=0,
        bytes_accessed=(3 * total + 2 * dim) * itemsize,
    )

    out2 = pl.pallas_call(
        _qff_kernel,
        out_shape=jax.ShapeDtypeStruct((work_rows, lane_dim), dtype),
        grid_spec=pltpu.PrefetchScalarGridSpec(
            num_scalar_prefetch=0,
            grid=(num_tiles,),
            in_specs=[
                pl.BlockSpec((1, lane_dim), lambda i: (0, 0)),   # s_q (resident)
                pl.BlockSpec((1, lane_dim), lambda i: (0, 0)),   # s_c (resident)
                pl.BlockSpec((tr, lane_dim), lambda i: (i, 0)),  # q
                pl.BlockSpec((tr, lane_dim), lambda i: (i, 0)),  # c
            ],
            out_specs=pl.BlockSpec((tr, lane_dim), lambda i: (i, 0)),
        ),
        compiler_params=pltpu.CompilerParams(
            dimension_semantics=("parallel",),
            vmem_limit_bytes=32 * 1024 * 1024,
        ),
        cost_estimate=cost,
    )(sq2, sc2, q2, c2)

    # No padding was added, so the unpack is a pure reshape (no HBM pass).
    return out2.reshape(orig_shape)


if __name__ == "__main__":
    # Primary case, matching the module spec (dim=32 -> lcm-packed lane path).
    batch, seq, dim = 2, 8, 32
    key = jax.random.PRNGKey(0)
    kq, kc = jax.random.split(key)
    q = jax.random.normal(kq, (batch, seq, dim), dtype=jnp.float32)
    c = jax.random.normal(kc, (batch, seq, dim), dtype=jnp.float32)

    # nn.Parameter(torch.full((dim,), 0.5)) equivalents.
    s_q = jnp.full((dim,), 0.5, dtype=jnp.float32)
    s_c = jnp.full((dim,), 0.5, dtype=jnp.float32)

    out = jax.block_until_ready(qff_combiner(s_q, s_c, q, c))
    ref = s_q * q + s_c * c
    assert out.shape == ref.shape
    assert jnp.allclose(out, ref, atol=1e-6, rtol=1e-6)

    # Extra coverage:
    #  (3, 40, 128): lane-aligned dim, single full block.
    #  (2, 37, 96) : dim not 128-aligned and total not lcm-divisible ->
    #                direct path with ceil-div grid + partial trailing block.
    #  (4, 512,128): large enough to exercise the forced 2-tile megacore split.
    for shape in [(3, 40, 128), (2, 37, 96), (4, 512, 128)]:
        d = shape[-1]
        kq2, kc2 = jax.random.split(jax.random.PRNGKey(1))
        qx = jax.random.normal(kq2, shape, dtype=jnp.float32)
        cx = jax.random.normal(kc2, shape, dtype=jnp.float32)
        sqx = jnp.linspace(0.1, 1.0, d, dtype=jnp.float32)
        scx = jnp.linspace(1.0, 0.1, d, dtype=jnp.float32)
        ox = jax.block_until_ready(qff_combiner(sqx, scx, qx, cx))
        rx = sqx * qx + scx * cx
        assert ox.shape == rx.shape
        assert jnp.allclose(ox, rx, atol=1e-5, rtol=1e-5)

    # bf16 coverage (sublane quantum 16, packed path, partial trailing block).
    kq3, kc3 = jax.random.split(jax.random.PRNGKey(2))
    qb = jax.random.normal(kq3, (2, 24, 64), dtype=jnp.bfloat16)
    cb = jax.random.normal(kc3, (2, 24, 64), dtype=jnp.bfloat16)
    sqb = jnp.linspace(0.1, 1.0, 64, dtype=jnp.float32)
    scb = jnp.linspace(1.0, 0.1, 64, dtype=jnp.float32)
    ob = jax.block_until_ready(qff_combiner(sqb, scb, qb, cb))
    rb = sqb * qb.astype(jnp.float32) + scb * cb.astype(jnp.float32)
    assert ob.shape == rb.shape
    assert jnp.allclose(ob.astype(jnp.float32), rb, atol=5e-2, rtol=5e-2)

    print("KERNEL_OK")
</pallas_src>

<mosaic_0001>
module attributes {stable_mosaic.version = 11 : i64} {
  func.func @_qff_kernel(%arg0: i32, %arg1: memref<1x128xf32, #tpu.memory_space<vmem>>, %arg2: memref<1x128xf32, #tpu.memory_space<vmem>>, %arg3: memref<4x128xf32, #tpu.memory_space<vmem>>, %arg4: memref<4x128xf32, #tpu.memory_space<vmem>>, %arg5: memref<4x128xf32, #tpu.memory_space<vmem>>) attributes {dimension_semantics = [#tpu.dimension_semantics<parallel>], iteration_bounds = array<i64: 1>, scalar_prefetch = 0 : i64, scratch_operands = 0 : i64, tpu.core_type = #tpu.core_type<tc>, window_params = [{pipeline_mode = #tpu.pipeline_mode<synchronous>, transform_indices = @transform_0, window_bounds = array<i64: 1, 128>}, {pipeline_mode = #tpu.pipeline_mode<synchronous>, transform_indices = @transform_1, window_bounds = array<i64: 1, 128>}, {transform_indices = @transform_2, window_bounds = array<i64: 4, 128>}, {transform_indices = @transform_3, window_bounds = array<i64: 4, 128>}, {transform_indices = @transform_4, window_bounds = array<i64: 4, 128>}]} {
    %c0 = arith.constant 0 : index
    %c0_0 = arith.constant 0 : index
    %0 = vector.load %arg1[%c0, %c0_0] : memref<1x128xf32, #tpu.memory_space<vmem>>, vector<1x128xf32>
    %c0_1 = arith.constant 0 : index
    %c0_2 = arith.constant 0 : index
    %1 = vector.load %arg3[%c0_1, %c0_2] : memref<4x128xf32, #tpu.memory_space<vmem>>, vector<4x128xf32>
    %2 = vector.broadcast %0 : vector<1x128xf32> to vector<4x128xf32>
    %3 = arith.mulf %2, %1 : vector<4x128xf32>
    %c0_3 = arith.constant 0 : index
    %c0_4 = arith.constant 0 : index
    %4 = vector.load %arg2[%c0_3, %c0_4] : memref<1x128xf32, #tpu.memory_space<vmem>>, vector<1x128xf32>
    %c0_5 = arith.constant 0 : index
    %c0_6 = arith.constant 0 : index
    %5 = vector.load %arg4[%c0_5, %c0_6] : memref<4x128xf32, #tpu.memory_space<vmem>>, vector<4x128xf32>
    %6 = vector.broadcast %4 : vector<1x128xf32> to vector<4x128xf32>
    %7 = arith.mulf %6, %5 : vector<4x128xf32>
    %8 = arith.addf %3, %7 : vector<4x128xf32>
    %c0_7 = arith.constant 0 : index
    %c0_8 = arith.constant 0 : index
    %9 = vector.load %arg5[%c0_7, %c0_8] : memref<4x128xf32, #tpu.memory_space<vmem>>, vector<4x128xf32>
    tpu.vector_store %arg5[%c0_7, %c0_8], %8 {strides = array<i32>} : memref<4x128xf32, #tpu.memory_space<vmem>>, vector<4x128xf32>,
    return
  }
  func.func @transform_0(%arg0: i32) -> (i32, i32) {
    %c0_i32 = arith.constant 0 : i32
    %c0_i32_0 = arith.constant 0 : i32
    %c0_i32_1 = arith.constant 0 : i32
    return %c0_i32, %c0_i32_0 : i32, i32
  }
  func.func @transform_1(%arg0: i32) -> (i32, i32) {
    %c0_i32 = arith.constant 0 : i32
    %c0_i32_0 = arith.constant 0 : i32
    %c0_i32_1 = arith.constant 0 : i32
    return %c0_i32, %c0_i32_0 : i32, i32
  }
  func.func @transform_2(%arg0: i32) -> (i32, i32) {
    %c0_i32 = arith.constant 0 : i32
    %c0_i32_0 = arith.constant 0 : i32
    return %arg0, %c0_i32 : i32, i32
  }
  func.func @transform_3(%arg0: i32) -> (i32, i32) {
    %c0_i32 = arith.constant 0 : i32
    %c0_i32_0 = arith.constant 0 : i32
    return %arg0, %c0_i32 : i32, i32
  }
  func.func @transform_4(%arg0: i32) -> (i32, i32) {
    %c0_i32 = arith.constant 0 : i32
    %c0_i32_0 = arith.constant 0 : i32
    return %arg0, %c0_i32 : i32, i32
  }
}

</mosaic_0001>

<llo_original>
// kernel: tpu_custom_call.1
$region0: #{tpu_custom_call.1}
  #allocation0 [shape = 'u32[]', space=smem, size = 0x4, offset = 0x4, fixed_abs, tag = 'smem constant byte address 0x4 - core index']
  #allocation1 [shape = 'u32[72,128]{1,0:T(1,128)}', space=vmem, size = 0x9000, scoped, tag = 'internal scratch']
  %s0 = inlined_call_operand.hbm [shape: f32[1,128], index: 0, kind: input, shape index: {}]
  %s1 = inlined_call_operand.hbm [shape: f32[1,128], index: 1, kind: input, shape index: {}]
  %s2 = inlined_call_operand.hbm [shape: f32[4,128], index: 2, kind: input, shape index: {}]
  %s3 = inlined_call_operand.hbm [shape: f32[4,128], index: 3, kind: input, shape index: {}]
  %s4 = inlined_call_operand.hbm [shape: f32[4,128], index: 4, kind: output, shape index: {}]
  %s5 = sld [smem:[#allocation0]]
  $region42: #{tpu_custom_call.1} parent=0
    _
  %s7 = ssub.s32 1, %s5
  %s8 = scalar_select 0, %s7, %s5
  $region1: #{tpu_custom_call.1} parent=0
    #allocation2 [shape = 'u8[512]{0}', space=vmem, size = 0x400, scoped, tag = 'input window, operand 0, single buffered']
    #allocation3 [shape = 's32[1]{0}', space=sflag, size = 0x4, scoped, tag = 'scoped memory for tpu_custom_call.1']
    #allocation4 [shape = 's32[1]{0}', space=sflag, size = 0x4, scoped, tag = 'scoped memory for tpu_custom_call.1']
    #allocation5 [shape = 'u8[512]{0}', space=vmem, size = 0x400, scoped, tag = 'input window, operand 1, single buffered']
    #allocation6 [shape = 's32[1]{0}', space=sflag, size = 0x4, scoped, tag = 'scoped memory for tpu_custom_call.1']
    #allocation7 [shape = 'u8[2048]{0}', space=vmem, size = 0x800, scoped, tag = 'input window, operand 2, single buffered']
    #allocation8 [shape = 'u8[2048]{0}', space=vmem, size = 0x800, scoped, tag = 'input window, operand 3, single buffered']
    #allocation9 [shape = 's32[1]{0}', space=sflag, size = 0x4, scoped, tag = 'scoped memory for tpu_custom_call.1']
    #allocation10 [shape = 'u8[2048]{0}', space=vmem, size = 0x800, scoped, tag = 'output window, operand 0, single buffered']
    %9 = vsyncpa [#allocation3], 0
    %10 = vsyncpa [#allocation6], 0
    %11 = vsyncpa [#allocation9], 0
    %12 = vsyncpa [#allocation4], 0
    // Predicated region
    $region2: #{tpu_custom_call.1} parent=1 // pred_check
      _
    $region3: #{tpu_custom_call.1} parent=1 // pred_check_branch
      %14 = sbr.rel (0) target = $region5
    $region4: #{tpu_custom_call.1} parent=1 // pred_region
      %16 = vsyncadd [#allocation3], 0
      %s18 = sshll.u32 %s0, 4
      %s19 = int_to_ptr.hbm [resolvable:$true] %s18
      %s20 = sshll.u32 [#allocation2], 4
      %s21 = int_to_ptr.vmem [resolvable:$true] %s20
      %23 = dma.hbm_to_vmem [thread:$0]  %s19, 16, %s21, [#allocation3]
    $region5: #{tpu_custom_call.1} parent=1 // pred_fallthru
      _
    // Predicated region
    $region6: #{tpu_custom_call.1} parent=1 // pred_check
      _
    $region7: #{tpu_custom_call.1} parent=1 // pred_check_branch
      %25 = sbr.rel (0) target = $region9
    $region8: #{tpu_custom_call.1} parent=1 // pred_region
      %27 = vsyncadd [#allocation6], 0
      %s29 = sshll.u32 %s1, 4
      %s30 = int_to_ptr.hbm [resolvable:$true] %s29
      %s31 = sshll.u32 [#allocation5], 4
      %s32 = int_to_ptr.vmem [resolvable:$true] %s31
      %34 = dma.hbm_to_vmem [thread:$0]  %s30, 16, %s32, [#allocation6]
    $region9: #{tpu_custom_call.1} parent=1 // pred_fallthru
      _
    // Predicated region
    $region10: #{tpu_custom_call.1} parent=1 // pred_check
      _
    $region11: #{tpu_custom_call.1} parent=1 // pred_check_branch
      %36 = sbr.rel (0) target = $region13
    $region12: #{tpu_custom_call.1} parent=1 // pred_region
      %38 = vsyncadd [#allocation6], 0
      %s40 = sshll.u32 %s2, 4
      %s41 = int_to_ptr.hbm [resolvable:$true] %s40
      %s42 = sshll.u32 [#allocation7], 4
      %s43 = int_to_ptr.vmem [resolvable:$true] %s42
      %45 = dma.hbm_to_vmem [thread:$0]  %s41, 64, %s43, [#allocation6]
    $region13: #{tpu_custom_call.1} parent=1 // pred_fallthru
      _
    // Predicated region
    $region14: #{tpu_custom_call.1} parent=1 // pred_check
      _
    $region15: #{tpu_custom_call.1} parent=1 // pred_check_branch
      %47 = sbr.rel (0) target = $region17
    $region16: #{tpu_custom_call.1} parent=1 // pred_region
      %49 = vsyncadd [#allocation9], 0
      %s51 = sshll.u32 %s3, 4
      %s52 = int_to_ptr.hbm [resolvable:$true] %s51
      %s53 = sshll.u32 [#allocation8], 4
      %s54 = int_to_ptr.vmem [resolvable:$true] %s53
      %56 = dma.hbm_to_vmem [thread:$0]  %s52, 64, %s54, [#allocation9]
    $region17: #{tpu_custom_call.1} parent=1 // pred_fallthru
      _
    // Predicated region
    $region18: #{tpu_custom_call.1} parent=1 // pred_check
      _
    $region19: #{tpu_custom_call.1} parent=1 // pred_check_branch
      %58 = sbr.rel (0) target = $region21
    $region20: #{tpu_custom_call.1} parent=1 // pred_region
      %60 = dma.done [#allocation3], 16
    $region21: #{tpu_custom_call.1} parent=1 // pred_fallthru
      _
    // Predicated region
    $region22: #{tpu_custom_call.1} parent=1 // pred_check
      _
    $region23: #{tpu_custom_call.1} parent=1 // pred_check_branch
      %62 = sbr.rel (0) target = $region25
    $region24: #{tpu_custom_call.1} parent=1 // pred_region
      %64 = dma.done [#allocation6], 16
    $region25: #{tpu_custom_call.1} parent=1 // pred_fallthru
      _
    // Predicated region
    $region26: #{tpu_custom_call.1} parent=1 // pred_check
      _
    $region27: #{tpu_custom_call.1} parent=1 // pred_check_branch
      %66 = sbr.rel (0) target = $region29
    $region28: #{tpu_custom_call.1} parent=1 // pred_region
      %68 = dma.done [#allocation6], 64
    $region29: #{tpu_custom_call.1} parent=1 // pred_fallthru
      _
    // Predicated region
    $region30: #{tpu_custom_call.1} parent=1 // pred_check
      _
    $region31: #{tpu_custom_call.1} parent=1 // pred_check_branch
      %70 = sbr.rel (0) target = $region33
    $region32: #{tpu_custom_call.1} parent=1 // pred_region
      %72 = dma.done [#allocation9], 64
    $region33: #{tpu_custom_call.1} parent=1 // pred_fallthru
      _
    %v73 = vld [vmem:[#allocation2] sm:$0x1]
    %v74 = vld [vmem:[#allocation7] sm:$0xf]
    %v76 = vperm.slane %v73, 0
    %v78 = vmul.f32 %v76, %v74
    %v79 = vld [vmem:[#allocation5] sm:$0x1]
    %v80 = vld [vmem:[#allocation8] sm:$0xf]
    %v82 = vperm.slane %v79, 0
    %v84 = vmul.f32 %v82, %v80
    %v85 = vadd.f32 %v78, %v84
    %86 = vst [vmem:[#allocation10] sm:$0xf] %v85
    // Predicated region
    $region34: #{tpu_custom_call.1} parent=1 // pred_check
      _
    $region35: #{tpu_custom_call.1} parent=1 // pred_check_branch
      %88 = sbr.rel (0) target = $region37
    $region36: #{tpu_custom_call.1} parent=1 // pred_region
      %90 = vsyncadd [#allocation4], 0
      %s92 = sshll.u32 [#allocation10], 4
      %s93 = int_to_ptr.vmem [resolvable:$true] %s92
      %s94 = sshll.u32 %s4, 4
      %s95 = int_to_ptr.hbm [resolvable:$true] %s94
      %97 = dma.vmem_to_hbm [thread:$0]  %s93, 64, %s95, [#allocation4]
    $region37: #{tpu_custom_call.1} parent=1 // pred_fallthru
      _
    // Predicated region
    $region38: #{tpu_custom_call.1} parent=1 // pred_check
      _
    $region39: #{tpu_custom_call.1} parent=1 // pred_check_branch
      %99 = sbr.rel (0) target = $region41
    $region40: #{tpu_custom_call.1} parent=1 // pred_region
      %101 = dma.done [#allocation4], 64
    $region41: #{tpu_custom_call.1} parent=1 // pred_fallthru
      _
    %102 = vsyncpa [#allocation3], 1
    %103 = vsyncpa [#allocation6], 1
    %104 = vsyncpa [#allocation9], 1
    %105 = vsyncpa [#allocation4], 1

</llo_original>
